<compile_context>
chip_gen: v7x
topology: tpu7x:2x2x1
jax: 0.10.0
libtpu: 0.0.40
codegen_flags: <defaults>
</compile_context>

<pallas_src>
import functools

import jax
import jax.numpy as jnp
from jax.experimental import pallas as pl
from jax.experimental.pallas import tpu as pltpu


_LANE = 128
_STEP_BYTES_TARGET = 2 * 1024 * 1024   # in+out block bytes per grid step (single buffer)
_VMEM_LIMIT_BYTES = 32 * 1024 * 1024   # scoped VMEM request; <= physical on v5e/v6e/v7x


def _round_up(x: int, m: int) -> int:
    return ((x + m - 1) // m) * m


def _softmax_kernel(x_ref, o_ref, *, no_bg: bool):
    """Channel softmax (+ optional background drop) for one (bn, C, bh, W) tile."""
    # Compute in f32 (v5e has no bf16 VPU/EUP; exact on all generations).
    # TODO(synk): on v7x with bf16 inputs, exp and the final scale could run in
    # bf16 to relieve the single EUP; kept f32 for portability/accuracy.
    x = x_ref[...].astype(jnp.float32)            # (bn, C, bh, W)

    # Channel axis (1) is a *major* axis of the block, so max/sum are plain
    # vreg-wise VPU ops — no cross-lane/sublane XLU traffic.
    m = jnp.max(x, axis=1, keepdims=True)
    e = jnp.exp(x - m)
    denom = jnp.sum(e, axis=1, keepdims=True)

    start = 1 if no_bg else 0
    # Exact divide (approx reciprocal exceeded tolerance); the background-channel
    # drop is fused into this single store.
    o_ref[...] = (e[:, start:] / denom).astype(o_ref.dtype)


def pooling_feature_extractor(
    logits_masks: jax.Array,
    *,
    no_bg: bool,
    from_logits: bool = True,
) -> jax.Array:
    """JAX/Pallas equivalent of PoolingFeatureExtractor.forward.

    Args:
        logits_masks: (N, C, H, W) array (NCHW, like PyTorch).
        no_bg: drop the background (first) channel of the result.
        from_logits: apply softmax over the channel axis if True.

    Returns:
        (N, C_out, H, W) array with C_out = C - 1 if no_bg else C.
    """
    n, c, h, w = logits_masks.shape
    c_out = c - 1 if no_bg else c

    # Pass-through paths: identity or plain channel slice — no kernel needed.
    if not from_logits:
        return logits_masks[:, 1:] if no_bg else logits_masks

    itemsize = jnp.dtype(logits_masks.dtype).itemsize
    sub = max(8, 32 // itemsize)          # sublane packing: 8 f32 / 16 bf16 / 32 i8
    lane_w = _round_up(w, _LANE)          # lane footprint of the W axis in VMEM

    def _row_bytes(rows: int) -> int:
        # Honest (sublane+lane padded) VMEM bytes of in+out blocks, per batch row.
        return (c + c_out) * _round_up(rows, sub) * lane_w * itemsize

    full_row = _row_bytes(h)
    if full_row <= _STEP_BYTES_TARGET:
        # Whole (C, H, W) slab per batch row; pack batch rows per step.
        bh = h
        bn = max(1, min(n, _STEP_BYTES_TARGET // full_row))
    else:
        # Tile the height axis in sublane-aligned chunks (partial last block OK).
        bn = 1
        group = _row_bytes(sub)
        bh = min(h, max(1, _STEP_BYTES_TARGET // group) * sub)

    grid_n = pl.cdiv(n, bn)
    grid_h = pl.cdiv(h, bh)

    # v7x has 2 TensorCores and shards "parallel" grid axes across them: make
    # sure small problems still have >=2 grid steps (harmless on v5e/v6e).
    if grid_n * grid_h == 1:
        if n >= 2:
            bn = pl.cdiv(n, 2)
            grid_n = pl.cdiv(n, bn)
        elif h > sub:
            bh = _round_up(pl.cdiv(h, 2), sub)
            grid_h = pl.cdiv(h, bh)

    elems = n * c * h * w
    cost = pl.CostEstimate(
        flops=5 * elems,                                    # max/sub/sum/div per element
        transcendentals=elems,                              # one exp per input element
        bytes_accessed=(c + c_out) * n * h * w * itemsize,
    )

    kernel = functools.partial(_softmax_kernel, no_bg=no_bg)

    return pl.pallas_call(
        kernel,
        out_shape=jax.ShapeDtypeStruct((n, c_out, h, w), logits_masks.dtype),
        grid_spec=pltpu.PrefetchScalarGridSpec(
            num_scalar_prefetch=0,
            grid=(grid_n, grid_h),
            in_specs=[
                pl.BlockSpec((bn, c, bh, w), lambda i, j: (i, 0, j, 0)),
            ],
            out_specs=pl.BlockSpec((bn, c_out, bh, w), lambda i, j: (i, 0, j, 0)),
        ),
        compiler_params=pltpu.CompilerParams(
            dimension_semantics=("parallel", "parallel"),
            vmem_limit_bytes=_VMEM_LIMIT_BYTES,
        ),
        cost_estimate=cost,
    )(logits_masks)


def _reference(logits_masks, *, no_bg, from_logits=True):
    x = logits_masks
    if from_logits:
        x = jax.nn.softmax(x, axis=1)
    if no_bg:
        x = x[:, 1:]
    return x


if __name__ == "__main__":
    key = jax.random.PRNGKey(0)
    k1, k2, k3 = jax.random.split(key, 3)

    # Case 1: batch=2, channels=4, 16x16 masks; softmax + drop background.
    x = jax.random.normal(k1, (2, 4, 16, 16), dtype=jnp.float32)
    out = jax.block_until_ready(
        pooling_feature_extractor(x, no_bg=True, from_logits=True)
    )
    ref = _reference(x, no_bg=True, from_logits=True)
    assert out.shape == (2, 3, 16, 16), out.shape
    assert jnp.allclose(out, ref, atol=2e-5, rtol=2e-5)

    # Case 2: keep the background channel.
    out2 = jax.block_until_ready(
        pooling_feature_extractor(x, no_bg=False, from_logits=True)
    )
    ref2 = _reference(x, no_bg=False, from_logits=True)
    assert out2.shape == (2, 4, 16, 16), out2.shape
    assert jnp.allclose(out2, ref2, atol=2e-5, rtol=2e-5)

    # Case 3: C / H / W not multiples of (8, 8, 128) — exercises blocks that
    # equal the (small, unaligned) array dims.
    y = jax.random.normal(k2, (2, 5, 10, 13), dtype=jnp.float32)
    out3 = jax.block_until_ready(
        pooling_feature_extractor(y, no_bg=True, from_logits=True)
    )
    ref3 = _reference(y, no_bg=True, from_logits=True)
    assert out3.shape == (2, 4, 10, 13), out3.shape
    assert jnp.allclose(out3, ref3, atol=2e-5, rtol=2e-5)

    # Case 4: from_logits=False — pure pass-through / channel slice (no kernel).
    probs = jax.nn.softmax(x, axis=1)
    out4 = jax.block_until_ready(
        pooling_feature_extractor(probs, no_bg=True, from_logits=False)
    )
    ref4 = _reference(probs, no_bg=True, from_logits=False)
    assert jnp.allclose(out4, ref4)

    # Case 5: larger image — exercises height tiling (bh < H) with a partial
    # last height block and a multi-step grid.
    z = jax.random.normal(k3, (1, 8, 256, 256), dtype=jnp.float32)
    out5 = jax.block_until_ready(
        pooling_feature_extractor(z, no_bg=True, from_logits=True)
    )
    ref5 = _reference(z, no_bg=True, from_logits=True)
    assert out5.shape == (1, 7, 256, 256), out5.shape
    assert jnp.allclose(out5, ref5, atol=2e-5, rtol=2e-5)

    print("KERNEL_OK")
</pallas_src>

<mosaic_0001>
module attributes {stable_mosaic.version = 11 : i64} {
  func.func @_softmax_kernel(%arg0: i32, %arg1: i32, %arg2: memref<1x4x16x16xf32, #tpu.memory_space<vmem>>, %arg3: memref<1x3x16x16xf32, #tpu.memory_space<vmem>>) attributes {dimension_semantics = [#tpu.dimension_semantics<parallel>, #tpu.dimension_semantics<parallel>], iteration_bounds = array<i64: 2, 1>, scalar_prefetch = 0 : i64, scratch_operands = 0 : i64, tpu.core_type = #tpu.core_type<tc>, window_params = [{transform_indices = @transform_0, window_bounds = array<i64: 1, 4, 16, 16>}, {transform_indices = @transform_1, window_bounds = array<i64: 1, 3, 16, 16>}]} {
    %c0 = arith.constant 0 : index
    %c0_0 = arith.constant 0 : index
    %c0_1 = arith.constant 0 : index
    %c0_2 = arith.constant 0 : index
    %0 = vector.load %arg2[%c0, %c0_0, %c0_1, %c0_2] : memref<1x4x16x16xf32, #tpu.memory_space<vmem>>, vector<1x4x16x16xf32>
    %cst = arith.constant dense<0xFF800000> : vector<1x16x16xf32>
    %1 = vector.multi_reduction <maximumf>, %0, %cst [1] : vector<1x4x16x16xf32> to vector<1x16x16xf32>
    %2 = vector.shape_cast %1 : vector<1x16x16xf32> to vector<1x1x16x16xf32>
    %3 = vector.broadcast %2 : vector<1x1x16x16xf32> to vector<1x4x16x16xf32>
    %4 = arith.subf %0, %3 : vector<1x4x16x16xf32>
    %5 = math.exp %4 : vector<1x4x16x16xf32>
    %cst_3 = arith.constant dense<0.000000e+00> : vector<1x16x16xf32>
    %6 = vector.multi_reduction <add>, %5, %cst_3 [1] : vector<1x4x16x16xf32> to vector<1x16x16xf32>
    %7 = vector.shape_cast %6 : vector<1x16x16xf32> to vector<1x1x16x16xf32>
    %8 = vector.extract_strided_slice %5 {offsets = [0, 1, 0, 0], sizes = [1, 3, 16, 16], strides = [1, 1, 1, 1]} : vector<1x4x16x16xf32> to vector<1x3x16x16xf32>
    %9 = vector.broadcast %7 : vector<1x1x16x16xf32> to vector<1x3x16x16xf32>
    %10 = arith.divf %8, %9 : vector<1x3x16x16xf32>
    %c0_4 = arith.constant 0 : index
    %c0_5 = arith.constant 0 : index
    %c0_6 = arith.constant 0 : index
    %c0_7 = arith.constant 0 : index
    %11 = vector.load %arg3[%c0_4, %c0_5, %c0_6, %c0_7] : memref<1x3x16x16xf32, #tpu.memory_space<vmem>>, vector<1x3x16x16xf32>
    tpu.vector_store %arg3[%c0_4, %c0_5, %c0_6, %c0_7], %10 {strides = array<i32>} : memref<1x3x16x16xf32, #tpu.memory_space<vmem>>, vector<1x3x16x16xf32>,
    return
  }
  func.func @transform_0(%arg0: i32, %arg1: i32) -> (i32, i32, i32, i32) {
    %c0_i32 = arith.constant 0 : i32
    %c0_i32_0 = arith.constant 0 : i32
    %c0_i32_1 = arith.constant 0 : i32
    return %arg0, %c0_i32, %arg1, %c0_i32_0 : i32, i32, i32, i32
  }
  func.func @transform_1(%arg0: i32, %arg1: i32) -> (i32, i32, i32, i32) {
    %c0_i32 = arith.constant 0 : i32
    %c0_i32_0 = arith.constant 0 : i32
    %c0_i32_1 = arith.constant 0 : i32
    return %arg0, %c0_i32, %arg1, %c0_i32_0 : i32, i32, i32, i32
  }
}

</mosaic_0001>

<llo_original>
// kernel: tpu_custom_call.1
$region0: #{tpu_custom_call.1}
  #allocation0 [shape = 'u32[]', space=smem, size = 0x4, offset = 0x4, fixed_abs, tag = 'smem constant byte address 0x4 - core index']
  #allocation1 [shape = 'u32[144,128]{1,0:T(1,128)}', space=vmem, size = 0x12000, scoped, tag = 'internal scratch']
  %s0 = inlined_call_operand.hbm [shape: f32[2,4,16,16], index: 0, kind: input, shape index: {}]
  %s1 = inlined_call_operand.hbm [shape: f32[2,3,16,16], index: 1, kind: output, shape index: {}]
  %s2 = sld [smem:[#allocation0]]
  $region41: #{tpu_custom_call.1} parent=0
    _
  %s4 = ssub.s32 1, %s2
  %s5 = scalar_select 0, %s4, %s2
  $region1: #{tpu_custom_call.1} parent=0
    #allocation2 [shape = 'u8[65536]{0}', space=vmem, size = 0x10000, scoped, tag = 'input window, operand 0']
    #allocation3 [shape = 's32[2]{0}', space=sflag, size = 0x8, scoped, tag = 'scoped memory for tpu_custom_call.1']
    #allocation4 [shape = 's32[2]{0}', space=sflag, size = 0x8, scoped, tag = 'scoped memory for tpu_custom_call.1']
    #allocation5 [shape = 'u8[49152]{0}', space=vmem, size = 0xc000, scoped, tag = 'output window, operand 0']
    %6 = vsyncpa [#allocation3], 0
    %s7 = scalar_lea.sflag [#allocation3], 1
    %8 = vsyncpa %s7, 0
    %9 = vsyncpa [#allocation4], 0
    %s10 = scalar_lea.sflag [#allocation4], 1
    %11 = vsyncpa %s10, 0
    loop: start=0, step=1, limit=4
    $region2: #{tpu_custom_call.1} parent=1 // loop_pre_header
      _
    $region3: #{tpu_custom_call.1} parent=1 // loop_header
      %s13 = sphi 0, %s17
      %p14 = scmp.ge.s32.totalorder %s13, 4
      %s20 = sphi 0, %s32
      %s21 = sphi 0, %s28
      %s22 = sphi 0, %s20
      %s23 = sphi 0, %s21
      %s24 = sphi 0, %s22
      %s25 = sphi 0, %s23
      %s37 = sphi 0, %s39
      %s40 = sphi 0, %s37
      %s41 = sphi 0, %s40
      %s57 = sphi 0, %s41
      %s65 = sphi 0, %s67
      %s68 = sphi 0, %s65
      %s69 = sphi 0, %s68
      %s85 = sphi 0, %s69
    $region4: #{tpu_custom_call.1} parent=1 // loop_header_branch
      %16 = sbr.rel (%p14) target = $region8
    $region5: #{tpu_custom_call.1} parent=1 // loop_body
      %s18 = ssub.s32 %s13, 1
      %s19 = ssub.s32 %s13, 2
      %s26 = sadd.s32 1, %s21
      %p27 = scmp.ge.s32.totalorder %s26, 1
      %s28 = scalar_select %p27, 0, %s26
      %s29 = sadd.s32 1, %s20
      %s30 = scalar_select %p27, %s29, %s20
      %p31 = scmp.ge.s32.totalorder %s30, 2
      %s32 = scalar_select %p31, 0, %s30
      %s33 = ssub.s32 %s20, %s32
      %s34 = ssub.s32 %s21, %s28
      %s35 = sor.u32 %s33, %s34
      %p36 = scmp.eq.s32.totalorder %s35, 0
      %s38 = sadd.s32 %s37, 1
      %s39 = scalar_select %p36, %s37, %s38
      %p42 = pneg %p36
      %p43 = scmp.eq.s32.totalorder %s13, 1
      %p44 = por %p42, %p43
      %p45 = scmp.ne.s32.totalorder %s37, %s40
      %p46 = scmp.eq.s32.totalorder %s13, 0
      %p47 = por %p45, %p46
      %p48 = scmp.ne.s32.totalorder %s37, %s40
      %p49 = scmp.eq.s32.totalorder %s18, 1
      %p50 = por %p48, %p49
      %p51 = scmp.ne.s32.totalorder %s40, %s41
      %p52 = scmp.eq.s32.totalorder %s18, 0
      %p53 = por %p51, %p52
      %p54 = scmp.ne.s32.totalorder %s40, %s41
      %p55 = scmp.eq.s32.totalorder %s19, 1
      %p56 = por %p54, %p55
      %p58 = scmp.ne.s32.totalorder %s41, %s57
      %p59 = scmp.eq.s32.totalorder %s19, 0
      %p60 = por %p58, %p59
      %s61 = ssub.s32 %s20, %s32
      %s62 = ssub.s32 %s21, %s28
      %s63 = sor.u32 %s61, %s62
      %p64 = scmp.eq.s32.totalorder %s63, 0
      %s66 = sadd.s32 %s65, 1
      %s67 = scalar_select %p64, %s65, %s66
      %p70 = pneg %p64
      %p71 = scmp.eq.s32.totalorder %s13, 1
      %p72 = por %p70, %p71
      %p73 = scmp.ne.s32.totalorder %s65, %s68
      %p74 = scmp.eq.s32.totalorder %s13, 0
      %p75 = por %p73, %p74
      %p76 = scmp.ne.s32.totalorder %s65, %s68
      %p77 = scmp.eq.s32.totalorder %s18, 1
      %p78 = por %p76, %p77
      %p79 = scmp.ne.s32.totalorder %s68, %s69
      %p80 = scmp.eq.s32.totalorder %s18, 0
      %p81 = por %p79, %p80
      %p82 = scmp.ne.s32.totalorder %s68, %s69
      %p83 = scmp.eq.s32.totalorder %s19, 1
      %p84 = por %p82, %p83
      %p86 = scmp.ne.s32.totalorder %s69, %s85
      %p87 = scmp.eq.s32.totalorder %s19, 0
      %p88 = por %p86, %p87
      %p89 = scmp.le.s32.totalorder 1, %s13
      %p90 = scmp.lt.s32.totalorder %s13, 3
      %p91 = pnand %p89, %p90
      %p92 = pneg %p91
      // Predicated region
      $region9: #{tpu_custom_call.1} parent=5 // pred_check
        _
      $region10: #{tpu_custom_call.1} parent=5 // pred_check_branch
        %94 = sbr.rel (%p91) target = $region12
      $region11: #{tpu_custom_call.1} parent=5 // pred_region
        %s95 = ssub.s32 %s13, 1
      $region12: #{tpu_custom_call.1} parent=5 // pred_fallthru
        _
      %p96 = scmp.lt.s32.totalorder %s13, 2
      // Predicated region
      $region13: #{tpu_custom_call.1} parent=5 // pred_check
        %p97 = pneg %p96
      $region14: #{tpu_custom_call.1} parent=5 // pred_check_branch
        %99 = sbr.rel (%p97) target = $region16
      $region15: #{tpu_custom_call.1} parent=5 // pred_region
        // Predicated region
        $region17: #{tpu_custom_call.1} parent=15 // pred_check
          %p100 = pneg %p47
        $region18: #{tpu_custom_call.1} parent=15 // pred_check_branch
          %102 = sbr.rel (%p100) target = $region20
        $region19: #{tpu_custom_call.1} parent=15 // pred_region
          %s103 = sand.u32 %s37, 1
          %s104 = scalar_lea.sflag [#allocation3], %s103
          %s105 = sand.u32 %s37, 1
          %s106 = smul.addr %s105, 64
          %s107 = scalar_lea.vmem [#allocation2], %s106
          %s108 = smul.u32 2, %s21
          %s110 = ssub.s32 1024, 1024
          %111 = vsyncadd %s104, %s110
          %s112 = smul.addr %s20, 8
          %s113 = sadd.s32 %s108, %s112
          %s114 = smul.addr %s113, 128
          %s115 = scalar_lea.hbm %s0, %s114
          %s116 = sshll.u32 %s107, 4
          %s117 = int_to_ptr.vmem [resolvable:$true] %s116
          %122 = dma.hbm_to_vmem [thread:$0]  %s115, 1024, %s117, %s104, 128, 128, 8
        $region20: #{tpu_custom_call.1} parent=15 // pred_fallthru
          _
      $region16: #{tpu_custom_call.1} parent=5 // pred_fallthru
        _
      %p123 = scmp.le.s32.totalorder 1, %s13
      %p124 = scmp.lt.s32.totalorder %s13, 3
      %p125 = pnand %p123, %p124
      %p126 = pneg %p125
      // Predicated region
      $region21: #{tpu_custom_call.1} parent=5 // pred_check
        _
      $region22: #{tpu_custom_call.1} parent=5 // pred_check_branch
        %128 = sbr.rel (%p125) target = $region24
      $region23: #{tpu_custom_call.1} parent=5 // pred_region
        %s129 = ssub.s32 %s13, 1
        %s130 = sand.u32 %s40, 1
        %s131 = scalar_lea.sflag [#allocation3], %s130
        %s132 = sand.u32 %s40, 1
        %s133 = smul.addr %s132, 64
        %s134 = scalar_lea.vmem [#allocation2], %s133
        // Predicated region
        $region25: #{tpu_custom_call.1} parent=23 // pred_check
          %p135 = pneg %p53
        $region26: #{tpu_custom_call.1} parent=23 // pred_check_branch
          %137 = sbr.rel (%p135) target = $region28
        $region27: #{tpu_custom_call.1} parent=23 // pred_region
          %138 = dma.done %s131, 1024
        $region28: #{tpu_custom_call.1} parent=23 // pred_fallthru
          _
        %s139 = sand.u32 %s40, 1
        %s140 = scalar_lea.sflag [#allocation3], %s139
        %s141 = sand.u32 %s40, 1
        %s142 = smul.addr %s141, 64
        %s143 = scalar_lea.vmem [#allocation2], %s142
        %p144 = pneg %p53
        %p145 = pneg %p50
        %p146 = pneg %p81
        %p147 = pneg %p78
        %s148 = sand.u32 %s68, 1
        %s149 = scalar_lea.sflag [#allocation4], %s148
        %s150 = sand.u32 %s68, 1
        %s151 = smul.addr %s150, 48
        %s152 = scalar_lea.vmem [#allocation5], %s151
        %s153 = smul.u32 2, %s23
        %s154 = smul.u32 2, %s23
        %v155 = vld [vmem:[%s134] sm:$0xff]
        %v156 = vld [vmem:[%s134 + $0x8] sm:$0xff]
        %v157 = vld [vmem:[%s134 + $0x10] sm:$0xff]
        %v158 = vld [vmem:[%s134 + $0x18] sm:$0xff]
        %v159 = vld [vmem:[%s134 + $0x20] sm:$0xff]
        %v160 = vld [vmem:[%s134 + $0x28] sm:$0xff]
        %v161 = vld [vmem:[%s134 + $0x30] sm:$0xff]
        %v162 = vld [vmem:[%s134 + $0x38] sm:$0xff]
        %vm163 = vcmask 130048
        %v164 = vsel %vm163, %v155, -inf
        %v165 = vsel %vm163, %v157, -inf
        %v166 = vsel %vm163, %v159, -inf
        %v167 = vmax.f32 %v164, %v166
        %v168 = vsel %vm163, %v161, -inf
        %v169 = vmax.f32 %v165, %v168
        %v170 = vmax.f32 %v167, %v169
        %v171 = vsel %vm163, %v156, -inf
        %v172 = vsel %vm163, %v158, -inf
        %v173 = vsel %vm163, %v160, -inf
        %v174 = vmax.f32 %v171, %v173
        %v175 = vsel %vm163, %v162, -inf
        %v176 = vmax.f32 %v172, %v175
        %v177 = vmax.f32 %v174, %v176
        %v178 = vsub.f32 %v155, %v170
        %v179 = vsub.f32 %v156, %v177
        %v180 = vsub.f32 %v157, %v170
        %v181 = vsub.f32 %v158, %v177
        %v182 = vsub.f32 %v159, %v170
        %v183 = vsub.f32 %v160, %v177
        %v184 = vsub.f32 %v161, %v170
        %v185 = vsub.f32 %v162, %v177
        %v186 = vmul.f32 %v178, 1.442695
        %v187 = vpow.pop %v186
        %v188 = vmul.f32 %v179, 1.442695
        %v189 = vpow.pop %v188
        %v190 = vmul.f32 %v180, 1.442695
        %v191 = vpow.pop %v190
        %v192 = vmul.f32 %v181, 1.442695
        %v193 = vpow.pop %v192
        %v194 = vmul.f32 %v182, 1.442695
        %v195 = vpow.pop %v194
        %v196 = vmul.f32 %v183, 1.442695
        %v197 = vpow.pop %v196
        %v198 = vmul.f32 %v184, 1.442695
        %v199 = vpow.pop %v198
        %v200 = vmul.f32 %v185, 1.442695
        %v201 = vpow.pop %v200
        %v202 = vsel %vm163, %v187, 0.0
        %v203 = vsel %vm163, %v191, 0.0
        %v204 = vadd.f32 %v202, %v203
        %v205 = vsel %vm163, %v195, 0.0
        %v206 = vadd.f32 %v204, %v205
        %v207 = vsel %vm163, %v199, 0.0
        %v208 = vadd.f32 %v206, %v207
        %v209 = vsel %vm163, %v189, 0.0
        %v210 = vsel %vm163, %v193, 0.0
        %v211 = vadd.f32 %v209, %v210
        %v212 = vsel %vm163, %v197, 0.0
        %v213 = vadd.f32 %v211, %v212
        %v214 = vsel %vm163, %v201, 0.0
        %v215 = vadd.f32 %v213, %v214
        %v216 = vrcp.pop %v208
        %v217 = vmul.f32 %v191, %v216
        %v218 = vrcp.pop %v215
        %v219 = vmul.f32 %v193, %v218
        %v220 = vmul.f32 %v195, %v216
        %v221 = vmul.f32 %v197, %v218
        %v222 = vmul.f32 %v199, %v216
        %v223 = vmul.f32 %v201, %v218
        %224 = vst.msk [vmem:[%s152] sm:$0xff] %vm163, %v217
        %225 = vst.msk [vmem:[%s152 + $0x8] sm:$0xff] %vm163, %v219
        %226 = vst.msk [vmem:[%s152 + $0x10] sm:$0xff] %vm163, %v220
        %227 = vst.msk [vmem:[%s152 + $0x18] sm:$0xff] %vm163, %v221
        %228 = vst.msk [vmem:[%s152 + $0x20] sm:$0xff] %vm163, %v222
        %229 = vst.msk [vmem:[%s152 + $0x28] sm:$0xff] %vm163, %v223
        %s230 = sand.u32 %s68, 1
        %s231 = scalar_lea.sflag [#allocation4], %s230
        %s232 = sand.u32 %s68, 1
        %s233 = smul.addr %s232, 48
        %s234 = scalar_lea.vmem [#allocation5], %s233
        // Predicated region
        $region29: #{tpu_custom_call.1} parent=23 // pred_check
          %p235 = pneg %p78
        $region30: #{tpu_custom_call.1} parent=23 // pred_check_branch
          %237 = sbr.rel (%p235) target = $region32
        $region31: #{tpu_custom_call.1} parent=23 // pred_region
          %s238 = smul.u32 2, %s23
          %s240 = ssub.s32 768, 768
          %241 = vsyncadd %s231, %s240
          %s242 = smul.addr %s22, 6
          %s243 = sadd.s32 %s238, %s242
          %s244 = smul.addr %s243, 128
          %s245 = scalar_lea.hbm %s1, %s244
          %s246 = sshll.u32 %s234, 4
          %s247 = int_to_ptr.vmem [resolvable:$true] %s246
          %252 = dma.vmem_to_hbm [thread:$0]  %s247, 768, %s245, %s231, 128, 128, 8
        $region32: #{tpu_custom_call.1} parent=23 // pred_fallthru
          _
      $region24: #{tpu_custom_call.1} parent=5 // pred_fallthru
        _
      %p253 = scmp.le.s32.totalorder 2, %s13
      // Predicated region
      $region33: #{tpu_custom_call.1} parent=5 // pred_check
        %p254 = pneg %p253
      $region34: #{tpu_custom_call.1} parent=5 // pred_check_branch
        %256 = sbr.rel (%p254) target = $region36
      $region35: #{tpu_custom_call.1} parent=5 // pred_region
        %s257 = ssub.s32 %s13, 2
        // Predicated region
        $region37: #{tpu_custom_call.1} parent=35 // pred_check
          %p258 = pneg %p84
        $region38: #{tpu_custom_call.1} parent=35 // pred_check_branch
          %260 = sbr.rel (%p258) target = $region40
        $region39: #{tpu_custom_call.1} parent=35 // pred_region
          %s261 = sand.u32 %s69, 1
          %s262 = scalar_lea.sflag [#allocation4], %s261
          %s263 = sand.u32 %s69, 1
          %s264 = smul.addr %s263, 48
          %s265 = scalar_lea.vmem [#allocation5], %s264
          %266 = dma.done %s262, 768
        $region40: #{tpu_custom_call.1} parent=35 // pred_fallthru
          _
      $region36: #{tpu_custom_call.1} parent=5 // pred_fallthru
        _
    $region6: #{tpu_custom_call.1} parent=1 // loop_footer
      %s17 = sadd.s32 1, %s13
    $region7: #{tpu_custom_call.1} parent=1 // loop_footer_branch
      %12 = sbr.rel target = $region3
    $region8: #{tpu_custom_call.1} parent=1 // loop_exit
      _
    %267 = vsyncpa [#allocation3], 1
    %s268 = scalar_lea.sflag [#allocation3], 1
    %269 = vsyncpa %s268, 1
    %270 = vsyncpa [#allocation4], 1
    %s271 = scalar_lea.sflag [#allocation4], 1
    %272 = vsyncpa %s271, 1

</llo_original>
